<compile_context>
chip_gen: v7x
topology: tpu7x:2x2x1
jax: 0.10.0
libtpu: 0.0.40
codegen_flags: <defaults>
</compile_context>

<pallas_src>
import functools

import jax
import jax.numpy as jnp
from jax.experimental import pallas as pl
from jax.experimental.pallas import tpu as pltpu  # noqa: F401  (TPU backend)


def _round_up(n, m):
    return ((n + m - 1) // m) * m


def _actor_critic_kernel(x_ref, p_ref, out_ref, *, in5, H, A, r_b1, r_wh, r_bh):
    # x_ref : (B, 5*D)   p_ref: packed parameter slab   out_ref: (B, A+1)
    x = x_ref[...]

    # Static slices of the packed slab; all row origins are multiples of 8.
    w1 = p_ref[0:in5, 0:H]                   # (5*D, H)
    b1 = p_ref[r_b1:r_b1 + 1, 0:H]           # (1, H)
    wh = p_ref[r_wh:r_wh + H, 0:A + 1]       # (H, A+1)  = [actor | critic]
    bh = p_ref[r_bh:r_bh + 1, 0:A + 1]       # (1, A+1)

    # mlp (no nonlinearity in the reference module)
    h = jnp.dot(x, w1, preferred_element_type=jnp.float32) + b1

    # fused actor+critic head: one MXU pass -> (B, A+1)
    heads = jnp.dot(h, wh, preferred_element_type=jnp.float32) + bh

    B, ap1 = out_ref.shape
    col = jax.lax.broadcasted_iota(jnp.int32, (B, ap1), 1)
    is_actor = col < A

    # Numerically-stable softmax over the actor columns only; the critic column
    # is masked with -inf (exp(-inf) == 0, no second mask needed).  Exact divide:
    # the approximate EUP reciprocal broke the 1e-5 tolerance and nothing here
    # is VALU-bound.
    masked = jnp.where(is_actor, heads, -jnp.inf)
    m = jnp.max(masked, axis=-1, keepdims=True)
    e = jnp.exp(masked - m)
    denom = jnp.sum(e, axis=-1, keepdims=True)
    probs = e / denom

    # single lane-dense-ish store: [softmax probs | critic value]
    out_ref[...] = jnp.where(is_actor, probs, heads)


def prepare_params(params):
    """One-time param prep (NOT in the per-call path):
    fuse the actor/critic heads and pack w1, b1, wh, bh into a single f32 slab
    with 8-row-aligned sections and 128-padded lanes."""
    w1, b1 = params["w1"], params["b1"]
    wa, ba = params["wa"], params["ba"]
    wc, bc = params["wc"], params["bc"]

    in5, H = w1.shape
    A = wa.shape[1]
    ap1 = A + 1

    wh = jnp.concatenate([wa, wc], axis=1)   # (H, A+1)
    bh = jnp.concatenate([ba, bc], axis=1)   # (1, A+1)

    r_b1 = _round_up(in5, 8)                 # b1 section start
    r_wh = r_b1 + 8                          # wh section start
    r_bh = r_wh + _round_up(H, 8)            # bh section start
    rows = r_bh + 8
    lanes = _round_up(max(H, ap1), 128)

    slab = jnp.zeros((rows, lanes), jnp.float32)
    slab = slab.at[0:in5, 0:H].set(w1)
    slab = slab.at[r_b1:r_b1 + 1, 0:H].set(b1)
    slab = slab.at[r_wh:r_wh + H, 0:ap1].set(wh)
    slab = slab.at[r_bh:r_bh + 1, 0:ap1].set(bh)

    dims = (in5, H, A, r_b1, r_wh, r_bh)     # static python ints
    return slab, dims


@functools.partial(jax.jit, static_argnames=("dims",))
def actor_critic_forward(x, slab, dims):
    """x: (B, S, D) float32. Returns (action_probs (B, A), state_value (B, 1))."""
    in5, H, A, r_b1, r_wh, r_bh = dims
    B, _, D = x.shape

    # Glue (fused under jit): last 5 timesteps, flattened -> (B, 5*D)
    x_flat = x[:, -5:, :].reshape(B, 5 * D)

    kernel = functools.partial(
        _actor_critic_kernel,
        in5=in5, H=H, A=A, r_b1=r_b1, r_wh=r_wh, r_bh=r_bh)

    # Single full-array block per operand (block_shape == full dims satisfies
    # the TPU tiling constraint); no grid at these tiny shapes.
    full_spec = lambda shape: pl.BlockSpec(shape, lambda: tuple(0 for _ in shape))

    out = pl.pallas_call(
        kernel,
        out_shape=jax.ShapeDtypeStruct((B, A + 1), jnp.float32),
        grid=(),
        in_specs=[full_spec(x_flat.shape), full_spec(slab.shape)],
        out_specs=full_spec((B, A + 1)),
    )(x_flat, slab)

    probs = out[:, :A]
    value = out[:, A:]
    return probs, value


def init_params(key, input_dim, hidden_dim, action_dim):
    """Deterministic synthetic init mirroring nn.Linear shapes.
    Weights stored pre-transposed as (in_features, out_features)."""
    k1, k2, k3, k4, k5, k6 = jax.random.split(key, 6)

    def uinit(k, shape, fan_in):
        bound = 1.0 / jnp.sqrt(jnp.float32(fan_in))
        return jax.random.uniform(k, shape, jnp.float32, -bound, bound)

    in5 = 5 * input_dim
    return {
        "w1": uinit(k1, (in5, hidden_dim), in5),
        "b1": uinit(k2, (1, hidden_dim), in5),
        "wa": uinit(k3, (hidden_dim, action_dim), hidden_dim),
        "ba": uinit(k4, (1, action_dim), hidden_dim),
        "wc": uinit(k5, (hidden_dim, 1), hidden_dim),
        "bc": uinit(k6, (1, 1), hidden_dim),
    }


def reference_forward(x, params):
    """Pure-JAX reference of the PyTorch forward, for correctness checking."""
    B, _, D = x.shape
    xf = x[:, -5:, :].reshape(B, 5 * D)
    h = xf @ params["w1"] + params["b1"]
    logits = h @ params["wa"] + params["ba"]
    probs = jax.nn.softmax(logits, axis=-1)
    value = h @ params["wc"] + params["bc"]
    return probs, value


if __name__ == "__main__":
    # Small shapes consistent with the module's forward:
    # x: (batch=2, seq=8, input_dim=4), hidden_dim=32, action_dim=4
    batch, seq, input_dim, hidden_dim, action_dim = 2, 8, 4, 32, 4

    key = jax.random.PRNGKey(0)
    kx, kp = jax.random.split(key)
    x = jax.random.normal(kx, (batch, seq, input_dim), dtype=jnp.float32)
    params = init_params(kp, input_dim, hidden_dim, action_dim)

    # One-time prep: fuse heads + pack params into a single slab.
    slab, dims = prepare_params(params)
    slab = jax.block_until_ready(slab)

    probs, value = actor_critic_forward(x, slab, dims)
    probs, value = jax.block_until_ready((probs, value))

    # Sanity check vs. pure-JAX reference
    ref_probs, ref_value = reference_forward(x, params)
    assert probs.shape == (batch, action_dim)
    assert value.shape == (batch, 1)
    assert jnp.allclose(probs, ref_probs, atol=1e-5, rtol=1e-5)
    assert jnp.allclose(value, ref_value, atol=1e-5, rtol=1e-5)
    assert jnp.allclose(jnp.sum(probs, axis=-1), 1.0, atol=1e-5)

    print("KERNEL_OK")
</pallas_src>

<mosaic_0001>
module attributes {stable_mosaic.version = 11 : i64} {
  func.func @_actor_critic_kernel(%arg0: memref<2x20xf32, #tpu.memory_space<vmem>>, %arg1: memref<72x128xf32, #tpu.memory_space<vmem>>, %arg2: memref<2x5xf32, #tpu.memory_space<vmem>>) attributes {dimension_semantics = [], scalar_prefetch = 0 : i64, scratch_operands = 0 : i64, tpu.core_type = #tpu.core_type<tc>} {
    %c0 = arith.constant 0 : index
    %c0_0 = arith.constant 0 : index
    %0 = vector.load %arg0[%c0, %c0_0] : memref<2x20xf32, #tpu.memory_space<vmem>>, vector<2x20xf32>
    %c0_1 = arith.constant 0 : index
    %c0_2 = arith.constant 0 : index
    %1 = vector.load %arg1[%c0_1, %c0_2] : memref<72x128xf32, #tpu.memory_space<vmem>>, vector<20x32xf32>
    %c24 = arith.constant 24 : index
    %c0_3 = arith.constant 0 : index
    %2 = vector.load %arg1[%c24, %c0_3] : memref<72x128xf32, #tpu.memory_space<vmem>>, vector<1x32xf32>
    %c32 = arith.constant 32 : index
    %c0_4 = arith.constant 0 : index
    %3 = vector.load %arg1[%c32, %c0_4] : memref<72x128xf32, #tpu.memory_space<vmem>>, vector<32x5xf32>
    %c64 = arith.constant 64 : index
    %c0_5 = arith.constant 0 : index
    %4 = vector.load %arg1[%c64, %c0_5] : memref<72x128xf32, #tpu.memory_space<vmem>>, vector<1x5xf32>
    %cst = arith.constant dense<0.000000e+00> : vector<2x32xf32>
    %5 = tpu.matmul %0, %1, %cst {dimension_numbers = #tpu.dot_dimension_numbers<[1], [0], [0], [1], [0, 0, 1, 1], [], []>} : vector<2x20xf32>, vector<20x32xf32>, vector<2x32xf32> -> vector<2x32xf32>
    %6 = vector.broadcast %2 : vector<1x32xf32> to vector<2x32xf32>
    %7 = arith.addf %5, %6 : vector<2x32xf32>
    %cst_6 = arith.constant dense<0.000000e+00> : vector<2x5xf32>
    %8 = tpu.matmul %7, %3, %cst_6 {dimension_numbers = #tpu.dot_dimension_numbers<[1], [0], [0], [1], [0, 0, 1, 1], [], []>} : vector<2x32xf32>, vector<32x5xf32>, vector<2x5xf32> -> vector<2x5xf32>
    %9 = vector.broadcast %4 : vector<1x5xf32> to vector<2x5xf32>
    %10 = arith.addf %8, %9 : vector<2x5xf32>
    %11 = tpu.iota {dimensions = array<i32: 1>} : vector<2x5xi32>
    %c4_i32 = arith.constant 4 : i32
    %12 = vector.broadcast %c4_i32 : i32 to vector<2x5xi32>
    %13 = arith.cmpi slt, %11, %12 : vector<2x5xi32>
    %cst_7 = arith.constant 0xFF800000 : f32
    %14 = vector.broadcast %cst_7 : f32 to vector<2x5xf32>
    %15 = arith.select %13, %10, %14 : vector<2x5xi1>, vector<2x5xf32>
    %cst_8 = arith.constant dense<0xFF800000> : vector<2xf32>
    %16 = vector.multi_reduction <maximumf>, %15, %cst_8 [1] : vector<2x5xf32> to vector<2xf32>
    %17 = vector.shape_cast %16 : vector<2xf32> to vector<2x1xf32>
    %18 = vector.broadcast %17 : vector<2x1xf32> to vector<2x5xf32>
    %19 = arith.subf %15, %18 : vector<2x5xf32>
    %20 = math.exp %19 : vector<2x5xf32>
    %cst_9 = arith.constant dense<0.000000e+00> : vector<2xf32>
    %21 = vector.multi_reduction <add>, %20, %cst_9 [1] : vector<2x5xf32> to vector<2xf32>
    %22 = vector.shape_cast %21 : vector<2xf32> to vector<2x1xf32>
    %23 = vector.broadcast %22 : vector<2x1xf32> to vector<2x5xf32>
    %24 = arith.divf %20, %23 : vector<2x5xf32>
    %25 = arith.select %13, %24, %10 : vector<2x5xi1>, vector<2x5xf32>
    %c0_10 = arith.constant 0 : index
    %c0_11 = arith.constant 0 : index
    %26 = vector.load %arg2[%c0_10, %c0_11] : memref<2x5xf32, #tpu.memory_space<vmem>>, vector<2x5xf32>
    tpu.vector_store %arg2[%c0_10, %c0_11], %25 {strides = array<i32>} : memref<2x5xf32, #tpu.memory_space<vmem>>, vector<2x5xf32>,
    return
  }
}

</mosaic_0001>

<llo_original>
// kernel: actor_critic_forward.1
$region0: #{actor_critic_forward.1}
  #allocation0 [shape = 'u32[]', space=smem, size = 0x4, offset = 0x4, fixed_abs, tag = 'smem constant byte address 0x4 - core index']
  #allocation1 [shape = 'u32[144,128]{1,0:T(1,128)}', space=vmem, size = 0x12000, scoped, tag = 'internal scratch']
  %s0 = inlined_call_operand.vmem [shape: f32[2,20], index: 0, kind: input, shape index: {}]
  %s1 = inlined_call_operand.hbm [shape: f32[72,128], index: 1, kind: input, shape index: {}]
  %s2 = inlined_call_operand.vmem [shape: f32[2,5], index: 2, kind: output, shape index: {}]
  %s3 = sld [smem:[#allocation0]]
  $region22: #{actor_critic_forward.1} parent=0
    _
  %s5 = ssub.s32 1, %s3
  %s6 = scalar_select 0, %s5, %s3
  $region1: #{actor_critic_forward.1} parent=0
    #allocation2 [shape = 'u8[36864]{0}', space=vmem, size = 0x9000, scoped, tag = 'input window, operand 1, single buffered']
    #allocation3 [shape = 's32[1]{0}', space=sflag, size = 0x4, scoped, tag = 'scoped memory for actor_critic_forward.1']
    %7 = vsyncpa [#allocation3], 0
    // Predicated region
    $region2: #{actor_critic_forward.1} parent=1 // pred_check
      _
    $region3: #{actor_critic_forward.1} parent=1 // pred_check_branch
      %9 = sbr.rel (0) target = $region5
    $region4: #{actor_critic_forward.1} parent=1 // pred_region
      _
    $region5: #{actor_critic_forward.1} parent=1 // pred_fallthru
      _
    // Predicated region
    $region6: #{actor_critic_forward.1} parent=1 // pred_check
      _
    $region7: #{actor_critic_forward.1} parent=1 // pred_check_branch
      %11 = sbr.rel (0) target = $region9
    $region8: #{actor_critic_forward.1} parent=1 // pred_region
      %s13 = ssub.s32 1152, 1152
      %14 = vsyncadd [#allocation3], %s13
      %s15 = sshll.u32 [#allocation2], 4
      %s16 = int_to_ptr.vmem [resolvable:$true] %s15
      %21 = dma.hbm_to_vmem [thread:$0]  %s1, 1152, %s16, [#allocation3], 128, 128, 8
    $region9: #{actor_critic_forward.1} parent=1 // pred_fallthru
      _
    // Predicated region
    $region10: #{actor_critic_forward.1} parent=1 // pred_check
      _
    $region11: #{actor_critic_forward.1} parent=1 // pred_check_branch
      %23 = sbr.rel (0) target = $region13
    $region12: #{actor_critic_forward.1} parent=1 // pred_region
      %24 = dma.done [#allocation3], 1152
    $region13: #{actor_critic_forward.1} parent=1 // pred_fallthru
      _
    %v25 = vld [vmem:[%s0] sm:$0x3]
    %v26 = vld [vmem:[#allocation2] sm:$0xff]
    %v27 = vld [vmem:[#allocation2 + $0x8] sm:$0xff]
    %v28 = vld [vmem:[#allocation2 + $0x10] sm:$0xf]
    %v29 = vld [vmem:[#allocation2 + $0x18] sm:$0x1]
    %v30 = vld [vmem:[#allocation2 + $0x20] sm:$0xff]
    %v31 = vld [vmem:[#allocation2 + $0x28] sm:$0xff]
    %v32 = vld [vmem:[#allocation2 + $0x30] sm:$0xff]
    %v33 = vld [vmem:[#allocation2 + $0x38] sm:$0xff]
    %v34 = vld [vmem:[#allocation2 + $0x40] sm:$0x1]
    %v35 = vlaneseq
    %v36 = vshrl.u32 %v35, 7
    %v37 = vsub.s32 0, %v36
    %v38 = vrot.slane %v29, %v37
    %vm39 = vcmask 162816
    %v41 = vsel %vm39, %v25, 0
    %vm43 = vcmask 1043456
    %v45 = vsel %vm43, %v28, 0
    %47 = vmatprep.subr.mxu0 0.0
    %48 = vmatpush1.msra.mxu0 %v26
    %49 = vmatprep.subr.mxu0 0.0
    %50 = vmatpush1.msra.mxu0 %v27
    %51 = vmatprep.subr.mxu0 0.0
    %52 = vmatpush1.msra.mxu0 %v45
    %53 = vmatprep.subr.mxu0 0.0
    %54 = vmatpush1.msra.mxu0 0.0
    %55 = vmatprep.subr.mxu0 0.0
    %56 = vmatpush1.msra.mxu0 0.0
    %57 = vmatprep.subr.mxu0 0.0
    %58 = vmatpush1.msra.mxu0 0.0
    %59 = vmatprep.subr.mxu0 0.0
    %60 = vmatpush1.msra.mxu0 0.0
    %61 = vmatprep.subr.mxu0 0.0
    %62 = vmatpush1.msra.mxu0 0.0
    %63 = vmatprep.subr.mxu0 0.0
    %64 = vmatpush1.msra.mxu0 0.0
    %65 = vmatprep.subr.mxu0 0.0
    %66 = vmatpush1.msra.mxu0 0.0
    %67 = vmatprep.subr.mxu0 0.0
    %68 = vmatpush1.msra.mxu0 0.0
    %69 = vmatprep.subr.mxu0 0.0
    %70 = vmatpush1.msra.mxu0 0.0
    %71 = vmatprep.subr.mxu0 0.0
    %72 = vmatpush1.msra.mxu0 0.0
    %73 = vmatprep.subr.mxu0 0.0
    %74 = vmatpush1.msra.mxu0 0.0
    %75 = vmatprep.subr.mxu0 0.0
    %76 = vmatpush1.msra.mxu0 0.0
    %77 = vmatprep.subr.mxu0 0.0
    %78 = vmatpush1.msra.mxu0 0.0
    %79 = vmatprep.subr.mxu0 0.0
    %80 = vmatpush1.msra.mxu0 0.0
    %81 = vmatprep.subr.mxu0 0.0
    %82 = vmatpush1.msra.mxu0 0.0
    %83 = vmatprep.subr.mxu0 0.0
    %84 = vmatpush1.msra.mxu0 0.0
    %85 = vmatprep.subr.mxu0 0.0
    %86 = vmatpush1.msra.mxu0 0.0
    %87 = vmatprep.subr.mxu0 0.0
    %88 = vmatpush1.msra.mxu0 0.0
    %89 = vmatprep.subr.mxu0 0.0
    %90 = vmatpush1.msra.mxu0 0.0
    %91 = vmatprep.subr.mxu0 0.0
    %92 = vmatpush1.msra.mxu0 0.0
    %93 = vmatprep.subr.mxu0 0.0
    %94 = vmatpush1.msra.mxu0 0.0
    %95 = vmatprep.subr.mxu0 0.0
    %96 = vmatpush1.msra.mxu0 0.0
    %97 = vmatprep.subr.mxu0 0.0
    %98 = vmatpush1.msra.mxu0 0.0
    %99 = vmatprep.subr.mxu0 0.0
    %100 = vmatpush1.msra.mxu0 0.0
    %101 = vmatprep.subr.mxu0 0.0
    %102 = vmatpush1.msra.mxu0 0.0
    %103 = vmatprep.subr.mxu0 0.0
    %104 = vmatpush1.msra.mxu0 0.0
    %105 = vmatprep.subr.mxu0 0.0
    %106 = vmatpush1.msra.mxu0 0.0
    %107 = vmatprep.subr.mxu0 0.0
    %108 = vmatpush1.msra.mxu0 0.0
    %109 = vmatprep.subr.mxu0 0.0
    %110 = vmatpush1.msra.mxu0 0.0
    %111 = vmatprep.mubr.f32.mxu0 0.0
    %112 = vmatmul.mubr.f32.gmra.mrb[0].mxu0 %v41
    %v113 = vpop.f32.mrb[0].mxu0
    %v114 = vadd.f32 %v38, %v113
    %v115 = vpop.f32.mrb[0].mxu0
    %116 = vdwg.mxu0
    %v117 = vlaneseq
    %v118 = vshrl.u32 %v117, 7
    %v119 = vsub.s32 0, %v118
    %v120 = vrot.slane %v34, %v119
    %vm121 = vcmask 261120
    %v123 = vsel %vm121, %v114, 0
    %125 = vmatprep.subr.mxu0 0.0
    %126 = vmatpush1.msra.mxu0 %v30
    %127 = vmatprep.subr.mxu0 0.0
    %128 = vmatpush1.msra.mxu0 %v31
    %129 = vmatprep.subr.mxu0 0.0
    %130 = vmatpush1.msra.mxu0 %v32
    %131 = vmatprep.subr.mxu0 0.0
    %132 = vmatpush1.msra.mxu0 %v33
    %133 = vmatprep.subr.mxu0 0.0
    %134 = vmatpush1.msra.mxu0 0.0
    %135 = vmatprep.subr.mxu0 0.0
    %136 = vmatpush1.msra.mxu0 0.0
    %137 = vmatprep.subr.mxu0 0.0
    %138 = vmatpush1.msra.mxu0 0.0
    %139 = vmatprep.subr.mxu0 0.0
    %140 = vmatpush1.msra.mxu0 0.0
    %141 = vmatprep.subr.mxu0 0.0
    %142 = vmatpush1.msra.mxu0 0.0
    %143 = vmatprep.subr.mxu0 0.0
    %144 = vmatpush1.msra.mxu0 0.0
    %145 = vmatprep.subr.mxu0 0.0
    %146 = vmatpush1.msra.mxu0 0.0
    %147 = vmatprep.subr.mxu0 0.0
    %148 = vmatpush1.msra.mxu0 0.0
    %149 = vmatprep.subr.mxu0 0.0
    %150 = vmatpush1.msra.mxu0 0.0
    %151 = vmatprep.subr.mxu0 0.0
    %152 = vmatpush1.msra.mxu0 0.0
    %153 = vmatprep.subr.mxu0 0.0
    %154 = vmatpush1.msra.mxu0 0.0
    %155 = vmatprep.subr.mxu0 0.0
    %156 = vmatpush1.msra.mxu0 0.0
    %157 = vmatprep.subr.mxu0 0.0
    %158 = vmatpush1.msra.mxu0 0.0
    %159 = vmatprep.subr.mxu0 0.0
    %160 = vmatpush1.msra.mxu0 0.0
    %161 = vmatprep.subr.mxu0 0.0
    %162 = vmatpush1.msra.mxu0 0.0
    %163 = vmatprep.subr.mxu0 0.0
    %164 = vmatpush1.msra.mxu0 0.0
    %165 = vmatprep.subr.mxu0 0.0
    %166 = vmatpush1.msra.mxu0 0.0
    %167 = vmatprep.subr.mxu0 0.0
    %168 = vmatpush1.msra.mxu0 0.0
    %169 = vmatprep.subr.mxu0 0.0
    %170 = vmatpush1.msra.mxu0 0.0
    %171 = vmatprep.subr.mxu0 0.0
    %172 = vmatpush1.msra.mxu0 0.0
    %173 = vmatprep.subr.mxu0 0.0
    %174 = vmatpush1.msra.mxu0 0.0
    %175 = vmatprep.subr.mxu0 0.0
    %176 = vmatpush1.msra.mxu0 0.0
    %177 = vmatprep.subr.mxu0 0.0
    %178 = vmatpush1.msra.mxu0 0.0
    %179 = vmatprep.subr.mxu0 0.0
    %180 = vmatpush1.msra.mxu0 0.0
    %181 = vmatprep.subr.mxu0 0.0
    %182 = vmatpush1.msra.mxu0 0.0
    %183 = vmatprep.subr.mxu0 0.0
    %184 = vmatpush1.msra.mxu0 0.0
    %185 = vmatprep.subr.mxu0 0.0
    %186 = vmatpush1.msra.mxu0 0.0
    %187 = vmatprep.subr.mxu0 0.0
    %188 = vmatpush1.msra.mxu0 0.0
    %189 = vmatprep.mubr.f32.mxu0 0.0
    %190 = vmatmul.mubr.f32.gmra.mrb[0].mxu0 %v123
    %v191 = vpop.f32.mrb[0].mxu0
    %v192 = vadd.f32 %v120, %v191
    %v193 = vpop.f32.mrb[0].mxu0
    %194 = vdwg.mxu0
    %v195 = vlaneseq
    %v196 = vand.u32 %v195, 127
    %vm197 = vcmp.lt.s32.totalorder %v196, 4
    %v198 = vsel %vm197, %v192, -inf
    %vm199 = vcmask 33792
    %v200 = vsel %vm199, %v198, -inf
    %201 = vmax.xlane.f32.xlu0 %v200
    %v202 = vpop.xlane.xlu0 %201
    %v203 = vsub.f32 %v198, %v202
    %v204 = vmul.f32 %v203, 1.442695
    %v205 = vpow.pop %v204
    %v206 = vsel %vm199, %v205, 0.0
    %207 = vadd.xlane.f32.xlu0 %v206
    %v208 = vpop.xlane.xlu0 %207
    %v209 = vrcp.pop %v208
    %v210 = vmul.f32 %v205, %v209
    %v211 = vsel %vm197, %v210, %v192
    %212 = vst.msk [vmem:[%s2] sm:$0x3] %vm199, %v211
    // Predicated region
    $region14: #{actor_critic_forward.1} parent=1 // pred_check
      _
    $region15: #{actor_critic_forward.1} parent=1 // pred_check_branch
      %214 = sbr.rel (0) target = $region17
    $region16: #{actor_critic_forward.1} parent=1 // pred_region
      _
    $region17: #{actor_critic_forward.1} parent=1 // pred_fallthru
      _
    // Predicated region
    $region18: #{actor_critic_forward.1} parent=1 // pred_check
      _
    $region19: #{actor_critic_forward.1} parent=1 // pred_check_branch
      %216 = sbr.rel (0) target = $region21
    $region20: #{actor_critic_forward.1} parent=1 // pred_region
      _
    $region21: #{actor_critic_forward.1} parent=1 // pred_fallthru
      _
    %217 = vsyncpa [#allocation3], 1

</llo_original>
